<compile_context>
chip_gen: v7x
topology: tpu7x:2x2x1
jax: 0.10.0
libtpu: 0.0.40
codegen_flags: <defaults>
</compile_context>

<pallas_src>
import functools
import math

import numpy as np
import jax
import jax.numpy as jnp
from jax.experimental import pallas as pl
from jax.experimental.pallas import tpu as pltpu


# ---------------------------------------------------------------------------
# In-kernel math helpers (traced inside the Pallas kernel).
# ---------------------------------------------------------------------------
_SQRT1_2 = 1.0 / math.sqrt(2.0)


def _erf(x):
    # Abramowitz & Stegun 7.1.26 rational approximation (|err| <= 1.5e-7).  Uses only
    # mul/add/exp so it is guaranteed to lower in Mosaic; the exp lands on the EUP slot.
    a1, a2, a3, a4, a5 = (0.254829592, -0.284496736, 1.421413741,
                          -1.453152027, 1.061405429)
    p = 0.3275911
    ax = jnp.abs(x)
    t = 1.0 / (1.0 + p * ax)
    poly = ((((a5 * t + a4) * t + a3) * t + a2) * t + a1) * t
    r = 1.0 - poly * jnp.exp(-ax * ax)
    return jnp.where(x >= 0, r, -r)


def _gelu_exact(x):
    # PyTorch nn.GELU() default (erf-based, not the tanh approximation).
    return 0.5 * x * (1.0 + _erf(x * _SQRT1_2))


# ---------------------------------------------------------------------------
# pltpu.roll rotate-direction calibration (tiny probe kernel, run once, pre-jit).
# ---------------------------------------------------------------------------
@functools.lru_cache(maxsize=None)
def _roll_shift_sign():
    """Returns +1 if pltpu.roll matches jnp.roll (result[i] = x[(i - shift) % n]),
    else -1.  Pinning this with a one-time runtime probe means the conv-tap shift
    direction can never silently flip across jax versions.  Called (and cached)
    before jit tracing in __main__."""
    def probe(x_ref, o_ref):
        o_ref[...] = pltpu.roll(x_ref[...], shift=1, axis=0)

    x = jax.lax.broadcasted_iota(jnp.float32, (8, 128), 0)
    y = pl.pallas_call(probe, out_shape=jax.ShapeDtypeStruct((8, 128), jnp.float32))(x)
    return 1 if float(y[1, 0]) == 0.0 else -1


# ---------------------------------------------------------------------------
# Fused Down kernel: 4x (3x3 conv + GroupNorm) + GELUs + residual + SiLU/Linear emb.
# ---------------------------------------------------------------------------
def _down_kernel(x_ref, t_ref, mask_ref,
                 w1_ref, g1_ref, b1_ref,
                 w2_ref, g2_ref, b2_ref,
                 w3_ref, g3_ref, b3_ref,
                 w4_ref, g4_ref, b4_ref,
                 we_ref, be_ref,
                 out_ref, *, Wo, roll_sign):
    hw = x_ref.shape[1]

    # 0/1 border masks for the 9 conv taps, shared by all four convs.
    masks = [mask_ref[k, :, :] for k in range(9)]                 # each (hw, 1)

    def conv3x3_gn(xf, w_ref, g_ref, b_ref):
        """3x3 'same' conv (bias=False) + GroupNorm(1, Cout) on a flattened (hw, Cin)
        channels-last map.  The 9 shifted taps are built with sublane rolls of the
        in-register activation (wrapped-in rows killed by the masks == zero padding),
        concatenated along the channel axis and contracted in ONE
        (hw, 9*Cin) @ (9*Cin, Cout) MXU matmul."""
        taps = []
        k = 0
        for kh in range(3):
            for kw in range(3):
                if kh == 1 and kw == 1:                           # centre tap
                    taps.append(xf)
                else:
                    s = (kh - 1) * Wo + (kw - 1)                  # flattened offset
                    shift = (-roll_sign * s) % hw
                    taps.append(pltpu.roll(xf, shift=shift, axis=0) * masks[k])
                k += 1
        patches = jnp.concatenate(taps, axis=-1)                  # (hw, 9*Cin)
        acc = jnp.dot(patches, w_ref[...], preferred_element_type=jnp.float32)

        # GroupNorm(num_groups=1): biased mean/var over all channels & positions of
        # this sample, eps=1e-5, then per-channel affine.
        mean = jnp.mean(acc)
        var = jnp.mean(jnp.square(acc - mean))
        y = (acc - mean) * jax.lax.rsqrt(var + 1e-5)
        return y * g_ref[...] + b_ref[...]                        # (1, Cout) broadcasts

    pooled = x_ref[0, :, :]                                       # (hw, Cin)

    # DoubleConv(Cin -> Cin, residual=True): gelu(x + GN2(conv2(gelu(GN1(conv1(x))))))
    h = _gelu_exact(conv3x3_gn(pooled, w1_ref, g1_ref, b1_ref))
    h = _gelu_exact(pooled + conv3x3_gn(h, w2_ref, g2_ref, b2_ref))

    # DoubleConv(Cin -> Cout): GN4(conv4(gelu(GN3(conv3(x)))))
    h = _gelu_exact(conv3x3_gn(h, w3_ref, g3_ref, b3_ref))
    h = conv3x3_gn(h, w4_ref, g4_ref, b4_ref)                     # (hw, Cout)

    # emb_layer: SiLU -> Linear(emb_dim, Cout), broadcast over all spatial positions.
    t = t_ref[...]                                                # (1, E)
    emb = jnp.dot(t * jax.nn.sigmoid(t), we_ref[...],
                  preferred_element_type=jnp.float32) + be_ref[...]   # (1, Cout)

    out_ref[0, :, :] = (h + emb).astype(out_ref.dtype)


def _tap_masks(Ho, Wo):
    """(9, Ho*Wo, 1) 0/1 masks: tap (kh, kw) is valid where neighbour (i+kh-1, j+kw-1)
    lies inside the image (implements the conv's zero padding)."""
    hw = Ho * Wo
    r = np.arange(hw) // Wo
    c = np.arange(hw) % Wo
    m = np.zeros((9, hw, 1), np.float32)
    k = 0
    for kh in range(3):
        for kw in range(3):
            ok = ((r + kh - 1 >= 0) & (r + kh - 1 < Ho) &
                  (c + kw - 1 >= 0) & (c + kw - 1 < Wo))
            m[k, :, 0] = ok
            k += 1
    return m


# ---------------------------------------------------------------------------
# Down.forward
# ---------------------------------------------------------------------------
def down_forward(x, t_embedding, params):
    """Pallas version of Down.forward.  x: (B, H, W, Cin) NHWC, t_embedding: (B, E)."""
    B, H, W, Cin = x.shape
    Ho, Wo = H // 2, W // 2
    hw = Ho * Wo
    E = t_embedding.shape[1]
    Cout = params["w4"].shape[-1]

    # MaxPool2d(2,2) as one fused XLA reshape+reduce: reads x once, writes the 4x
    # smaller pooled map once; everything downstream runs in a single Pallas kernel.
    pooled = jnp.max(x.reshape(B, Ho, 2, Wo, 2, Cin), axis=(2, 4)).reshape(B, hw, Cin)

    # Trace-time constants.
    masks = jnp.asarray(_tap_masks(Ho, Wo))                       # (9, hw, 1)
    roll_sign = _roll_shift_sign()

    # Pre-reshape conv weights (3, 3, Ci, Co) -> (9*Ci, Co): tap-major / channel-minor
    # row order matches the in-kernel tap concatenation, so each conv is one matmul.
    w1 = params["w1"].reshape(9 * Cin, Cin)
    w2 = params["w2"].reshape(9 * Cin, Cin)
    w3 = params["w3"].reshape(9 * Cin, Cout)
    w4 = params["w4"].reshape(9 * Cout, Cout)

    def shared(shape):                     # whole array, same block every grid step
        nd = len(shape)
        return pl.BlockSpec(shape, lambda *_: (0,) * nd)

    in_specs = [
        pl.BlockSpec((1, hw, Cin), lambda b: (b, 0, 0)),          # pooled (per sample)
        pl.BlockSpec((1, E), lambda b: (b, 0)),                   # t_embedding (per b)
        shared((9, hw, 1)),                                       # tap masks
        shared((9 * Cin, Cin)), shared((1, Cin)), shared((1, Cin)),      # conv1 / GN1
        shared((9 * Cin, Cin)), shared((1, Cin)), shared((1, Cin)),      # conv2 / GN2
        shared((9 * Cin, Cout)), shared((1, Cout)), shared((1, Cout)),   # conv3 / GN3
        shared((9 * Cout, Cout)), shared((1, Cout)), shared((1, Cout)),  # conv4 / GN4
        shared((E, Cout)), shared((1, Cout)),                     # emb_layer Linear
    ]

    out = pl.pallas_call(
        functools.partial(_down_kernel, Wo=Wo, roll_sign=roll_sign),
        out_shape=jax.ShapeDtypeStruct((B, hw, Cout), jnp.float32),
        grid=(B,),
        in_specs=in_specs,
        out_specs=pl.BlockSpec((1, hw, Cout), lambda b: (b, 0, 0)),
        compiler_params=pltpu.CompilerParams(
            dimension_semantics=("parallel",)),     # batch shards across TCs on v7x
    )(pooled, t_embedding, masks,
      w1, params["g1"], params["b1"],
      w2, params["g2"], params["b2"],
      w3, params["g3"], params["b3"],
      w4, params["g4"], params["b4"],
      params["we"], params["be"])

    return out.reshape(B, Ho, Wo, Cout)              # (B, hw, C) -> NHWC is a bitcast


# ---------------------------------------------------------------------------
# Deterministic parameter initialization (shapes from Down.__init__).
# ---------------------------------------------------------------------------
def init_params(key, in_channels, out_channels, emb_dim):
    ks = jax.random.split(key, 5)

    def conv_w(k, cin, cout):
        # Stored HWIO: (kh, kw, Cin, Cout).  To load real PyTorch weights
        # (Cout, Cin, kh, kw), convert with w_torch.permute(2, 3, 1, 0).
        return 0.1 * jax.random.normal(k, (3, 3, cin, cout), jnp.float32)

    return {
        "w1": conv_w(ks[0], in_channels, in_channels),
        "g1": jnp.ones((1, in_channels), jnp.float32),
        "b1": jnp.zeros((1, in_channels), jnp.float32),
        "w2": conv_w(ks[1], in_channels, in_channels),
        "g2": jnp.ones((1, in_channels), jnp.float32),
        "b2": jnp.zeros((1, in_channels), jnp.float32),
        "w3": conv_w(ks[2], in_channels, out_channels),
        "g3": jnp.ones((1, out_channels), jnp.float32),
        "b3": jnp.zeros((1, out_channels), jnp.float32),
        "w4": conv_w(ks[3], out_channels, out_channels),
        "g4": jnp.ones((1, out_channels), jnp.float32),
        "b4": jnp.zeros((1, out_channels), jnp.float32),
        "we": 0.1 * jax.random.normal(ks[4], (emb_dim, out_channels), jnp.float32),
        "be": jnp.zeros((1, out_channels), jnp.float32),
    }


# ---------------------------------------------------------------------------
# Pure-XLA reference (independent code path) for a tolerance check.
# ---------------------------------------------------------------------------
def down_reference(x, t, params):
    pooled = jax.lax.reduce_window(x, -jnp.inf, jax.lax.max,
                                   (1, 2, 2, 1), (1, 2, 2, 1), "VALID")

    def conv(h, w):
        return jax.lax.conv_general_dilated(
            h, w, window_strides=(1, 1), padding=((1, 1), (1, 1)),
            dimension_numbers=("NHWC", "HWIO", "NHWC"),
            precision=jax.lax.Precision.HIGHEST)

    def gn(h, g, b):
        m = jnp.mean(h, axis=(1, 2, 3), keepdims=True)
        v = jnp.mean(jnp.square(h - m), axis=(1, 2, 3), keepdims=True)
        return ((h - m) * jax.lax.rsqrt(v + 1e-5) * g.reshape(1, 1, 1, -1)
                + b.reshape(1, 1, 1, -1))

    gelu = functools.partial(jax.nn.gelu, approximate=False)
    h = gelu(gn(conv(pooled, params["w1"]), params["g1"], params["b1"]))
    h = gelu(pooled + gn(conv(h, params["w2"]), params["g2"], params["b2"]))
    h = gelu(gn(conv(h, params["w3"]), params["g3"], params["b3"]))
    h = gn(conv(h, params["w4"]), params["g4"], params["b4"])
    emb = jax.nn.silu(t) @ params["we"] + params["be"]            # (B, Cout)
    return h + emb[:, None, None, :]


if __name__ == "__main__":
    key = jax.random.PRNGKey(0)
    kx, kt, kp = jax.random.split(key, 3)

    B, Cin, H, W = 2, 4, 16, 16          # small shapes consistent with the module
    Cout, emb_dim = 8, 32

    params = init_params(kp, Cin, Cout, emb_dim)
    x_nchw = jax.random.normal(kx, (B, Cin, H, W), jnp.float32)   # PyTorch layout
    t_emb = jax.random.normal(kt, (B, emb_dim), jnp.float32)
    x_nhwc = jnp.transpose(x_nchw, (0, 2, 3, 1))                  # kernel layout (NHWC)

    _roll_shift_sign()                   # calibrate rotate direction once, pre-jit

    out = jax.jit(down_forward)(x_nhwc, t_emb, params)
    out = jax.block_until_ready(out)

    assert out.shape == (B, H // 2, W // 2, Cout), out.shape
    assert bool(jnp.all(jnp.isfinite(out)))

    # Tolerance check against the independent pure-XLA reference (loose bound only to
    # absorb MXU/XLA f32 matmul-pass differences; any structural error would be O(1)).
    ref = down_reference(x_nhwc, t_emb, params)
    err = float(jnp.max(jnp.abs(out - ref)))
    assert err < 5e-2, f"max |pallas - reference| = {err}"

    print("KERNEL_OK")
</pallas_src>

<mosaic_0001>
module attributes {stable_mosaic.version = 11 : i64} {
  func.func @probe(%arg0: memref<8x128xf32, #tpu.memory_space<vmem>>, %arg1: memref<8x128xf32, #tpu.memory_space<vmem>>) attributes {dimension_semantics = [], scalar_prefetch = 0 : i64, scratch_operands = 0 : i64, tpu.core_type = #tpu.core_type<tc>} {
    %c0 = arith.constant 0 : index
    %c0_0 = arith.constant 0 : index
    %0 = vector.load %arg0[%c0, %c0_0] : memref<8x128xf32, #tpu.memory_space<vmem>>, vector<8x128xf32>
    %c1_i32 = arith.constant 1 : i32
    %1 = tpu.dynamic_rotate %0 by %c1_i32 dim 0 : vector<8x128xf32>, i32 -> vector<8x128xf32>
    %c0_1 = arith.constant 0 : index
    %c0_2 = arith.constant 0 : index
    %2 = vector.load %arg1[%c0_1, %c0_2] : memref<8x128xf32, #tpu.memory_space<vmem>>, vector<8x128xf32>
    tpu.vector_store %arg1[%c0_1, %c0_2], %1 {strides = array<i32>} : memref<8x128xf32, #tpu.memory_space<vmem>>, vector<8x128xf32>,
    return
  }
}

</mosaic_0001>

<llo_original>
// kernel: tpu_custom_call.1
$region0: #{tpu_custom_call.1}
  #allocation0 [shape = 'u32[]', space=smem, size = 0x4, offset = 0x4, fixed_abs, tag = 'smem constant byte address 0x4 - core index']
  #allocation1 [shape = 'u32[144,128]{1,0:T(1,128)}', space=vmem, size = 0x12000, scoped, tag = 'internal scratch']
  %s0 = inlined_call_operand.hbm [shape: f32[8,128], index: 0, kind: input, shape index: {}]
  %s1 = inlined_call_operand.hbm [shape: f32[8,128], index: 1, kind: output, shape index: {}]
  %s2 = sld [smem:[#allocation0]]
  $region18: #{tpu_custom_call.1} parent=0
    _
  %s4 = ssub.s32 1, %s2
  %s5 = scalar_select 0, %s4, %s2
  $region1: #{tpu_custom_call.1} parent=0
    #allocation2 [shape = 'u8[4096]{0}', space=vmem, size = 0x1000, scoped, tag = 'input window, operand 0, single buffered']
    #allocation3 [shape = 's32[1]{0}', space=sflag, size = 0x4, scoped, tag = 'scoped memory for tpu_custom_call.1']
    #allocation4 [shape = 's32[1]{0}', space=sflag, size = 0x4, scoped, tag = 'scoped memory for tpu_custom_call.1']
    #allocation5 [shape = 'u8[4096]{0}', space=vmem, size = 0x1000, scoped, tag = 'output window, operand 0, single buffered']
    %6 = vsyncpa [#allocation3], 0
    %7 = vsyncpa [#allocation4], 0
    // Predicated region
    $region2: #{tpu_custom_call.1} parent=1 // pred_check
      _
    $region3: #{tpu_custom_call.1} parent=1 // pred_check_branch
      %9 = sbr.rel (0) target = $region5
    $region4: #{tpu_custom_call.1} parent=1 // pred_region
      %s11 = ssub.s32 128, 128
      %12 = vsyncadd [#allocation3], %s11
      %s14 = sshll.u32 [#allocation2], 4
      %s15 = int_to_ptr.vmem [resolvable:$true] %s14
      %17 = dma.hbm_to_vmem [thread:$0]  %s0, 128, %s15, [#allocation3]
    $region5: #{tpu_custom_call.1} parent=1 // pred_fallthru
      _
    // Predicated region
    $region6: #{tpu_custom_call.1} parent=1 // pred_check
      _
    $region7: #{tpu_custom_call.1} parent=1 // pred_check_branch
      %19 = sbr.rel (0) target = $region9
    $region8: #{tpu_custom_call.1} parent=1 // pred_region
      %20 = dma.done [#allocation3], 128
    $region9: #{tpu_custom_call.1} parent=1 // pred_fallthru
      _
    %v21 = vld [vmem:[#allocation2] sm:$0xff]
    %v22 = vrot.slane %v21, 7
    %23 = vst [vmem:[#allocation5] sm:$0xff] %v22
    // Predicated region
    $region10: #{tpu_custom_call.1} parent=1 // pred_check
      _
    $region11: #{tpu_custom_call.1} parent=1 // pred_check_branch
      %25 = sbr.rel (0) target = $region13
    $region12: #{tpu_custom_call.1} parent=1 // pred_region
      %s27 = ssub.s32 128, 128
      %28 = vsyncadd [#allocation4], %s27
      %s30 = sshll.u32 [#allocation5], 4
      %s31 = int_to_ptr.vmem [resolvable:$true] %s30
      %33 = dma.vmem_to_hbm [thread:$0]  %s31, 128, %s1, [#allocation4]
    $region13: #{tpu_custom_call.1} parent=1 // pred_fallthru
      _
    // Predicated region
    $region14: #{tpu_custom_call.1} parent=1 // pred_check
      _
    $region15: #{tpu_custom_call.1} parent=1 // pred_check_branch
      %35 = sbr.rel (0) target = $region17
    $region16: #{tpu_custom_call.1} parent=1 // pred_region
      %36 = dma.done [#allocation4], 128
    $region17: #{tpu_custom_call.1} parent=1 // pred_fallthru
      _
    %37 = vsyncpa [#allocation3], 1
    %38 = vsyncpa [#allocation4], 1

</llo_original>
